<compile_context>
chip_gen: v5e
topology: v5e:2x2
jax: 0.10.0
libtpu: 0.0.40
codegen_flags: <defaults>
</compile_context>

<pallas_src>
import jax
import jax.numpy as jnp
from jax.experimental import pallas as pl
from jax.experimental.pallas import tpu as pltpu


def _round_up(x, m):
    return ((x + m - 1) // m) * m


def _f1_kernel(yhat_ref, y_ref, f1_ref, tp_ref, sy_ref, syh_ref):
    b = pl.program_id(1)  # batch (reduction) axis — innermost

    @pl.when(b == 0)
    def _():
        tp_ref[...] = jnp.zeros_like(tp_ref)
        sy_ref[...] = jnp.zeros_like(sy_ref)
        syh_ref[...] = jnp.zeros_like(syh_ref)

    yh = yhat_ref[...].astype(jnp.float32)  # y_hat.float()
    y = y_ref[...].astype(jnp.float32)
    tb, tc = yh.shape

    # Fold rows into (tb//8, 8, tc) slabs: the sum over axis 0 is whole-vreg
    # elementwise adds (VALU), no per-step cross-sublane reduce.
    tp_ref[...] += jnp.sum((y * yh).reshape(tb // 8, 8, tc), axis=0)
    sy_ref[...] += jnp.sum(y.reshape(tb // 8, 8, tc), axis=0)
    syh_ref[...] += jnp.sum(yh.reshape(tb // 8, 8, tc), axis=0)

    @pl.when(b == pl.num_programs(1) - 1)
    def _():
        # One cross-sublane collapse per kernel (per class tile).
        tp = jnp.sum(tp_ref[...], axis=0, keepdims=True)
        sy = jnp.sum(sy_ref[...], axis=0, keepdims=True)
        syh = jnp.sum(syh_ref[...], axis=0, keepdims=True)
        fp = syh - tp
        fn = sy - tp
        p = tp / (tp + fp + 1e-07)
        r = tp / (tp + fn + 1e-07)
        f1 = 2.0 * p * r / (p + r + 1e-07)
        f1 = jnp.where(jnp.isnan(f1), jnp.zeros_like(f1), f1)
        f1_ref[...] = f1


def f1_score(y_hat, y, *, max_batch_tile=512):
    """y_hat, y: (N, C) arrays (any real dtype; cast to f32 in-kernel).

    Returns (C,) float32 per-class F1. Matches F1Score.forward.
    """
    # TODO(synk): `threshold` / requires_grad from the nn.Module have no kernel meaning.
    N, C = y_hat.shape
    assert y.shape == (N, C)

    # Minimum sublane multiple for the (narrower of the) input dtypes.
    itemsize = min(jnp.dtype(y_hat.dtype).itemsize, jnp.dtype(y.dtype).itemsize)
    sub = max(8, 32 // max(1, itemsize))  # f32:8, bf16:16, int8/bool:32

    # Batch tile: as large as sensible (mem-bound), collapses to one step when small.
    tb = min(_round_up(max_batch_tile, sub), _round_up(N, sub))
    n_pad = _round_up(N, tb)
    if n_pad != N:
        pad = n_pad - N
        # Zero rows contribute nothing to tp / sum_y / sum_yhat -> exact.
        y_hat = jnp.pad(y_hat, ((0, pad), (0, 0)))
        y = jnp.pad(y, ((0, pad), (0, 0)))

    # Class tile: only split when C is large and 128-aligned ("parallel" axis,
    # lets v7x use both TensorCores; no-op elsewhere).
    if C > 512 and C % 512 == 0:
        tc = 512
    elif C > 512 and C % 256 == 0:
        tc = 256
    elif C > 512 and C % 128 == 0:
        tc = 128
    else:
        tc = C

    grid = (C // tc, n_pad // tb)

    out = pl.pallas_call(
        _f1_kernel,
        out_shape=jax.ShapeDtypeStruct((1, C), jnp.float32),
        grid_spec=pltpu.PrefetchScalarGridSpec(
            num_scalar_prefetch=0,
            grid=grid,
            in_specs=[
                pl.BlockSpec((tb, tc), lambda ci, bi: (bi, ci)),
                pl.BlockSpec((tb, tc), lambda ci, bi: (bi, ci)),
            ],
            out_specs=pl.BlockSpec((1, tc), lambda ci, bi: (0, ci)),
            scratch_shapes=[
                pltpu.VMEM((8, tc), jnp.float32),  # tp
                pltpu.VMEM((8, tc), jnp.float32),  # sum(y)
                pltpu.VMEM((8, tc), jnp.float32),  # sum(y_hat)
            ],
        ),
        compiler_params=pltpu.CompilerParams(
            dimension_semantics=("parallel", "arbitrary"),
        ),
    )(y_hat, y)
    return out[0]


def _f1_reference(y_hat, y):
    y_hat = y_hat.astype(jnp.float32)
    y = y.astype(jnp.float32)
    tp = jnp.sum(y * y_hat, 0)
    fp = jnp.sum((1 - y) * y_hat, 0)
    fn = jnp.sum(y * (1 - y_hat), 0)
    p = tp / (tp + fp + 1e-07)
    r = tp / (tp + fn + 1e-07)
    f1 = 2 * p * r / (p + r + 1e-07)
    return jnp.where(jnp.isnan(f1), jnp.zeros_like(f1), f1)


if __name__ == "__main__":
    key = jax.random.PRNGKey(0)
    k1, k2, k3, k4 = jax.random.split(key, 4)

    CUTOFF = 0.5  # module's threshold; unused in forward()

    # Small case: 64 samples, 128 classes, narrow (bf16) binary inputs.
    N, C = 64, 128
    y_hat = (jax.random.uniform(k1, (N, C)) > CUTOFF).astype(jnp.bfloat16)
    y = (jax.random.uniform(k2, (N, C)) > 0.5).astype(jnp.bfloat16)

    f1 = f1_score(y_hat, y)
    jax.block_until_ready(f1)
    ref = _f1_reference(y_hat, y)
    assert f1.shape == (C,)
    assert jnp.allclose(f1, ref, atol=1e-5, rtol=1e-5)

    # Ragged batch case (exercises zero-padding + multi-slab accumulation).
    N2, C2 = 200, 128
    y_hat2 = (jax.random.uniform(k3, (N2, C2)) > CUTOFF).astype(jnp.bfloat16)
    y2 = (jax.random.uniform(k4, (N2, C2)) > 0.5).astype(jnp.bfloat16)

    f1b = f1_score(y_hat2, y2)
    jax.block_until_ready(f1b)
    refb = _f1_reference(y_hat2, y2)
    assert f1b.shape == (C2,)
    assert jnp.allclose(f1b, refb, atol=1e-5, rtol=1e-5)

    print("KERNEL_OK")
</pallas_src>

<mosaic_0001>
module attributes {stable_mosaic.version = 11 : i64} {
  func.func @_f1_kernel(%arg0: i32, %arg1: i32, %arg2: memref<64x128xbf16, #tpu.memory_space<vmem>>, %arg3: memref<64x128xbf16, #tpu.memory_space<vmem>>, %arg4: memref<1x128xf32, #tpu.memory_space<vmem>>, %arg5: memref<8x128xf32, #tpu.memory_space<vmem>>, %arg6: memref<8x128xf32, #tpu.memory_space<vmem>>, %arg7: memref<8x128xf32, #tpu.memory_space<vmem>>) attributes {dimension_semantics = [#tpu.dimension_semantics<parallel>, #tpu.dimension_semantics<arbitrary>], iteration_bounds = array<i64: 1, 1>, scalar_prefetch = 0 : i64, scratch_operands = 3 : i64, tpu.core_type = #tpu.core_type<tc>, window_params = [{transform_indices = @transform_0, window_bounds = array<i64: 64, 128>}, {transform_indices = @transform_1, window_bounds = array<i64: 64, 128>}, {transform_indices = @transform_2, window_bounds = array<i64: 1, 128>}]} {
    %c0_i32 = arith.constant 0 : i32
    %0 = arith.cmpi eq, %arg1, %c0_i32 : i32
    %1 = arith.extui %0 : i1 to i32
    %c0_i32_0 = arith.constant 0 : i32
    %2 = arith.cmpi ne, %1, %c0_i32_0 : i32
    scf.if %2 {
      %cst_20 = arith.constant 0.000000e+00 : f32
      %26 = vector.broadcast %cst_20 : f32 to vector<8x128xf32>
      %c0_21 = arith.constant 0 : index
      %c0_22 = arith.constant 0 : index
      %27 = vector.load %arg5[%c0_21, %c0_22] : memref<8x128xf32, #tpu.memory_space<vmem>>, vector<8x128xf32>
      tpu.vector_store %arg5[%c0_21, %c0_22], %26 {strides = array<i32>} : memref<8x128xf32, #tpu.memory_space<vmem>>, vector<8x128xf32>,
      %cst_23 = arith.constant 0.000000e+00 : f32
      %28 = vector.broadcast %cst_23 : f32 to vector<8x128xf32>
      %c0_24 = arith.constant 0 : index
      %c0_25 = arith.constant 0 : index
      %29 = vector.load %arg6[%c0_24, %c0_25] : memref<8x128xf32, #tpu.memory_space<vmem>>, vector<8x128xf32>
      tpu.vector_store %arg6[%c0_24, %c0_25], %28 {strides = array<i32>} : memref<8x128xf32, #tpu.memory_space<vmem>>, vector<8x128xf32>,
      %cst_26 = arith.constant 0.000000e+00 : f32
      %30 = vector.broadcast %cst_26 : f32 to vector<8x128xf32>
      %c0_27 = arith.constant 0 : index
      %c0_28 = arith.constant 0 : index
      %31 = vector.load %arg7[%c0_27, %c0_28] : memref<8x128xf32, #tpu.memory_space<vmem>>, vector<8x128xf32>
      tpu.vector_store %arg7[%c0_27, %c0_28], %30 {strides = array<i32>} : memref<8x128xf32, #tpu.memory_space<vmem>>, vector<8x128xf32>,
    } else {
    }
    %c0 = arith.constant 0 : index
    %c0_1 = arith.constant 0 : index
    %3 = vector.load %arg2[%c0, %c0_1] : memref<64x128xbf16, #tpu.memory_space<vmem>>, vector<64x128xbf16>
    %4 = arith.extf %3 : vector<64x128xbf16> to vector<64x128xf32>
    %c0_2 = arith.constant 0 : index
    %c0_3 = arith.constant 0 : index
    %5 = vector.load %arg3[%c0_2, %c0_3] : memref<64x128xbf16, #tpu.memory_space<vmem>>, vector<64x128xbf16>
    %6 = arith.extf %5 : vector<64x128xbf16> to vector<64x128xf32>
    %c0_4 = arith.constant 0 : index
    %c0_5 = arith.constant 0 : index
    %7 = vector.load %arg5[%c0_4, %c0_5] : memref<8x128xf32, #tpu.memory_space<vmem>>, vector<8x128xf32>
    %8 = arith.mulf %6, %4 : vector<64x128xf32>
    %9 = vector.shape_cast %8 : vector<64x128xf32> to vector<8x8x128xf32>
    %cst = arith.constant dense<0.000000e+00> : vector<8x128xf32>
    %10 = vector.multi_reduction <add>, %9, %cst [0] : vector<8x8x128xf32> to vector<8x128xf32>
    %11 = arith.addf %7, %10 : vector<8x128xf32>
    %c0_6 = arith.constant 0 : index
    %c0_7 = arith.constant 0 : index
    %12 = vector.load %arg5[%c0_6, %c0_7] : memref<8x128xf32, #tpu.memory_space<vmem>>, vector<8x128xf32>
    tpu.vector_store %arg5[%c0_6, %c0_7], %11 {strides = array<i32>} : memref<8x128xf32, #tpu.memory_space<vmem>>, vector<8x128xf32>,
    %c0_8 = arith.constant 0 : index
    %c0_9 = arith.constant 0 : index
    %13 = vector.load %arg6[%c0_8, %c0_9] : memref<8x128xf32, #tpu.memory_space<vmem>>, vector<8x128xf32>
    %14 = vector.shape_cast %6 : vector<64x128xf32> to vector<8x8x128xf32>
    %cst_10 = arith.constant dense<0.000000e+00> : vector<8x128xf32>
    %15 = vector.multi_reduction <add>, %14, %cst_10 [0] : vector<8x8x128xf32> to vector<8x128xf32>
    %16 = arith.addf %13, %15 : vector<8x128xf32>
    %c0_11 = arith.constant 0 : index
    %c0_12 = arith.constant 0 : index
    %17 = vector.load %arg6[%c0_11, %c0_12] : memref<8x128xf32, #tpu.memory_space<vmem>>, vector<8x128xf32>
    tpu.vector_store %arg6[%c0_11, %c0_12], %16 {strides = array<i32>} : memref<8x128xf32, #tpu.memory_space<vmem>>, vector<8x128xf32>,
    %c0_13 = arith.constant 0 : index
    %c0_14 = arith.constant 0 : index
    %18 = vector.load %arg7[%c0_13, %c0_14] : memref<8x128xf32, #tpu.memory_space<vmem>>, vector<8x128xf32>
    %19 = vector.shape_cast %4 : vector<64x128xf32> to vector<8x8x128xf32>
    %cst_15 = arith.constant dense<0.000000e+00> : vector<8x128xf32>
    %20 = vector.multi_reduction <add>, %19, %cst_15 [0] : vector<8x8x128xf32> to vector<8x128xf32>
    %21 = arith.addf %18, %20 : vector<8x128xf32>
    %c0_16 = arith.constant 0 : index
    %c0_17 = arith.constant 0 : index
    %22 = vector.load %arg7[%c0_16, %c0_17] : memref<8x128xf32, #tpu.memory_space<vmem>>, vector<8x128xf32>
    tpu.vector_store %arg7[%c0_16, %c0_17], %21 {strides = array<i32>} : memref<8x128xf32, #tpu.memory_space<vmem>>, vector<8x128xf32>,
    %c0_i32_18 = arith.constant 0 : i32
    %23 = arith.cmpi eq, %arg1, %c0_i32_18 : i32
    %24 = arith.extui %23 : i1 to i32
    %c0_i32_19 = arith.constant 0 : i32
    %25 = arith.cmpi ne, %24, %c0_i32_19 : i32
    scf.if %25 {
      %c0_20 = arith.constant 0 : index
      %c0_21 = arith.constant 0 : index
      %26 = vector.load %arg5[%c0_20, %c0_21] : memref<8x128xf32, #tpu.memory_space<vmem>>, vector<8x128xf32>
      %cst_22 = arith.constant dense<0.000000e+00> : vector<128xf32>
      %27 = vector.multi_reduction <add>, %26, %cst_22 [0] : vector<8x128xf32> to vector<128xf32>
      %28 = vector.shape_cast %27 : vector<128xf32> to vector<1x128xf32>
      %c0_23 = arith.constant 0 : index
      %c0_24 = arith.constant 0 : index
      %29 = vector.load %arg6[%c0_23, %c0_24] : memref<8x128xf32, #tpu.memory_space<vmem>>, vector<8x128xf32>
      %cst_25 = arith.constant dense<0.000000e+00> : vector<128xf32>
      %30 = vector.multi_reduction <add>, %29, %cst_25 [0] : vector<8x128xf32> to vector<128xf32>
      %31 = vector.shape_cast %30 : vector<128xf32> to vector<1x128xf32>
      %c0_26 = arith.constant 0 : index
      %c0_27 = arith.constant 0 : index
      %32 = vector.load %arg7[%c0_26, %c0_27] : memref<8x128xf32, #tpu.memory_space<vmem>>, vector<8x128xf32>
      %cst_28 = arith.constant dense<0.000000e+00> : vector<128xf32>
      %33 = vector.multi_reduction <add>, %32, %cst_28 [0] : vector<8x128xf32> to vector<128xf32>
      %34 = vector.shape_cast %33 : vector<128xf32> to vector<1x128xf32>
      %35 = arith.subf %34, %28 : vector<1x128xf32>
      %36 = arith.subf %31, %28 : vector<1x128xf32>
      %37 = arith.addf %28, %35 : vector<1x128xf32>
      %cst_29 = arith.constant 1.000000e-07 : f32
      %38 = vector.broadcast %cst_29 : f32 to vector<1x128xf32>
      %39 = arith.addf %37, %38 : vector<1x128xf32>
      %40 = arith.divf %28, %39 : vector<1x128xf32>
      %41 = arith.addf %28, %36 : vector<1x128xf32>
      %cst_30 = arith.constant 1.000000e-07 : f32
      %42 = vector.broadcast %cst_30 : f32 to vector<1x128xf32>
      %43 = arith.addf %41, %42 : vector<1x128xf32>
      %44 = arith.divf %28, %43 : vector<1x128xf32>
      %cst_31 = arith.constant 2.000000e+00 : f32
      %45 = vector.broadcast %cst_31 : f32 to vector<1x128xf32>
      %46 = arith.mulf %45, %40 : vector<1x128xf32>
      %47 = arith.mulf %46, %44 : vector<1x128xf32>
      %48 = arith.addf %40, %44 : vector<1x128xf32>
      %cst_32 = arith.constant 1.000000e-07 : f32
      %49 = vector.broadcast %cst_32 : f32 to vector<1x128xf32>
      %50 = arith.addf %48, %49 : vector<1x128xf32>
      %51 = arith.divf %47, %50 : vector<1x128xf32>
      %52 = arith.cmpf one, %51, %51 : vector<1x128xf32>
      %cst_33 = arith.constant 0.000000e+00 : f32
      %53 = vector.broadcast %cst_33 : f32 to vector<1x128xf32>
      %54 = arith.select %52, %53, %51 : vector<1x128xi1>, vector<1x128xf32>
      %c0_34 = arith.constant 0 : index
      %c0_35 = arith.constant 0 : index
      %55 = vector.load %arg4[%c0_34, %c0_35] : memref<1x128xf32, #tpu.memory_space<vmem>>, vector<1x128xf32>
      tpu.vector_store %arg4[%c0_34, %c0_35], %54 {strides = array<i32>} : memref<1x128xf32, #tpu.memory_space<vmem>>, vector<1x128xf32>,
    } else {
    }
    return
  }
  func.func @transform_0(%arg0: i32, %arg1: i32) -> (i32, i32) {
    %c0_i32 = arith.constant 0 : i32
    return %arg1, %arg0 : i32, i32
  }
  func.func @transform_1(%arg0: i32, %arg1: i32) -> (i32, i32) {
    %c0_i32 = arith.constant 0 : i32
    return %arg1, %arg0 : i32, i32
  }
  func.func @transform_2(%arg0: i32, %arg1: i32) -> (i32, i32) {
    %c0_i32 = arith.constant 0 : i32
    %c0_i32_0 = arith.constant 0 : i32
    return %c0_i32, %arg0 : i32, i32
  }
}

</mosaic_0001>

<llo_original>
// kernel: tpu_custom_call.1
$region0: #{tpu_custom_call.1}
  #allocation0 [shape = 'u32[]', space=smem, size = 0x4, offset = 0x4, fixed_abs, tag = 'smem constant byte address 0x4 - core index']
  #allocation1 [shape = 'u32[72,128]{1,0:T(1,128)}', space=vmem, size = 0x9000, scoped, tag = 'internal scratch']
  #allocation2 [shape = 'f32[8,128]{1,0:T(8,128)}', space=vmem, size = 0x1000, scoped, tag = 'scratch operand']
  #allocation3 [shape = 'f32[8,128]{1,0:T(8,128)}', space=vmem, size = 0x1000, scoped, tag = 'scratch operand']
  #allocation4 [shape = 'f32[8,128]{1,0:T(8,128)}', space=vmem, size = 0x1000, scoped, tag = 'scratch operand']
  %s0 = inlined_call_operand.hbm [shape: bf16[64,128], index: 0, kind: input, shape index: {}]
  %s1 = inlined_call_operand.hbm [shape: bf16[64,128], index: 1, kind: input, shape index: {}]
  %s2 = inlined_call_operand.hbm [shape: f32[1,128], index: 2, kind: output, shape index: {}]
  %s3 = sld [smem:[#allocation0]]
  $region34: #{tpu_custom_call.1} parent=0
    _
  %s5 = ssub.s32 1, %s3
  %s6 = scalar_select 0, %s5, %s3
  $region1: #{tpu_custom_call.1} parent=0
    #allocation5 [shape = 'u8[16384]{0}', space=vmem, size = 0x4000, scoped, tag = 'input window, operand 0, single buffered']
    #allocation6 [shape = 's32[1]{0}', space=sflag, size = 0x4, scoped, tag = 'scoped memory for tpu_custom_call.1']
    #allocation7 [shape = 's32[1]{0}', space=sflag, size = 0x4, scoped, tag = 'scoped memory for tpu_custom_call.1']
    #allocation8 [shape = 'u8[16384]{0}', space=vmem, size = 0x4000, scoped, tag = 'input window, operand 1, single buffered']
    #allocation9 [shape = 's32[1]{0}', space=sflag, size = 0x4, scoped, tag = 'scoped memory for tpu_custom_call.1']
    #allocation10 [shape = 'u8[512]{0}', space=vmem, size = 0x400, scoped, tag = 'output window, operand 0, single buffered']
    %7 = vsyncpa [#allocation6], 0
    %8 = vsyncpa [#allocation9], 0
    %9 = vsyncpa [#allocation7], 0
    // Predicated region
    $region2: #{tpu_custom_call.1} parent=1 // pred_check
      _
    $region3: #{tpu_custom_call.1} parent=1 // pred_check_branch
      %11 = sbr.rel (0) target = $region5
    $region4: #{tpu_custom_call.1} parent=1 // pred_region
      %13 = vsyncadd [#allocation6], 0
      %s14 = sshll.u32 %s0, 4
      %s15 = int_to_ptr.hbm [resolvable:$true] %s14
      %s16 = sshll.u32 [#allocation5], 4
      %s17 = int_to_ptr.vmem [resolvable:$true] %s16
      %22 = dma.hbm_to_vmem [thread:$0]  %s15, 512, %s17, [#allocation6], 64, 64, 4
    $region5: #{tpu_custom_call.1} parent=1 // pred_fallthru
      _
    // Predicated region
    $region6: #{tpu_custom_call.1} parent=1 // pred_check
      _
    $region7: #{tpu_custom_call.1} parent=1 // pred_check_branch
      %24 = sbr.rel (0) target = $region9
    $region8: #{tpu_custom_call.1} parent=1 // pred_region
      %26 = vsyncadd [#allocation9], 0
      %s27 = sshll.u32 %s1, 4
      %s28 = int_to_ptr.hbm [resolvable:$true] %s27
      %s29 = sshll.u32 [#allocation8], 4
      %s30 = int_to_ptr.vmem [resolvable:$true] %s29
      %35 = dma.hbm_to_vmem [thread:$0]  %s28, 512, %s30, [#allocation9], 64, 64, 4
    $region9: #{tpu_custom_call.1} parent=1 // pred_fallthru
      _
    // Predicated region
    $region10: #{tpu_custom_call.1} parent=1 // pred_check
      _
    $region11: #{tpu_custom_call.1} parent=1 // pred_check_branch
      %37 = sbr.rel (0) target = $region13
    $region12: #{tpu_custom_call.1} parent=1 // pred_region
      %39 = dma.done [#allocation6], 512
    $region13: #{tpu_custom_call.1} parent=1 // pred_fallthru
      _
    // Predicated region
    $region14: #{tpu_custom_call.1} parent=1 // pred_check
      _
    $region15: #{tpu_custom_call.1} parent=1 // pred_check_branch
      %41 = sbr.rel (0) target = $region17
    $region16: #{tpu_custom_call.1} parent=1 // pred_region
      %43 = dma.done [#allocation9], 512
    $region17: #{tpu_custom_call.1} parent=1 // pred_fallthru
      _
    %p44 = scmp.eq.s32.totalorder 0, 0
    // Predicated region
    $region18: #{tpu_custom_call.1} parent=1 // pred_check
      %p45 = pneg %p44
    $region19: #{tpu_custom_call.1} parent=1 // pred_check_branch
      %47 = sbr.rel (%p45) target = $region21
    $region20: #{tpu_custom_call.1} parent=1 // pred_region
      %48 = vst [vmem:[#allocation2] sm:$0xff] 0.0
      %49 = vst [vmem:[#allocation3] sm:$0xff] 0.0
      %50 = vst [vmem:[#allocation4] sm:$0xff] 0.0
    $region21: #{tpu_custom_call.1} parent=1 // pred_fallthru
      _
    %v51 = vld [vmem:[#allocation5] sm:$0xf]
    %v52 = vld [vmem:[#allocation5 + $0x4] sm:$0xf]
    %v53 = vld [vmem:[#allocation5 + $0x8] sm:$0xf]
    %v54 = vld [vmem:[#allocation5 + $0xc] sm:$0xf]
    %v55 = vld [vmem:[#allocation5 + $0x10] sm:$0xf]
    %v56 = vld [vmem:[#allocation5 + $0x14] sm:$0xf]
    %v57 = vld [vmem:[#allocation5 + $0x18] sm:$0xf]
    %v58 = vld [vmem:[#allocation5 + $0x1c] sm:$0xf]
    %v59 = vunpack.c.l.bf16 %v51
    %v60 = vunpack.c.l.bf16 %v52
    %v61 = vunpack.c.l.bf16 %v53
    %v62 = vunpack.c.l.bf16 %v54
    %v63 = vunpack.c.l.bf16 %v55
    %v64 = vunpack.c.l.bf16 %v56
    %v65 = vunpack.c.l.bf16 %v57
    %v66 = vunpack.c.l.bf16 %v58
    %v67 = vld [vmem:[#allocation8] sm:$0xf]
    %v68 = vld [vmem:[#allocation8 + $0x4] sm:$0xf]
    %v69 = vld [vmem:[#allocation8 + $0x8] sm:$0xf]
    %v70 = vld [vmem:[#allocation8 + $0xc] sm:$0xf]
    %v71 = vld [vmem:[#allocation8 + $0x10] sm:$0xf]
    %v72 = vld [vmem:[#allocation8 + $0x14] sm:$0xf]
    %v73 = vld [vmem:[#allocation8 + $0x18] sm:$0xf]
    %v74 = vld [vmem:[#allocation8 + $0x1c] sm:$0xf]
    %v75 = vunpack.c.l.bf16 %v67
    %v76 = vunpack.c.l.bf16 %v68
    %v77 = vunpack.c.l.bf16 %v69
    %v78 = vunpack.c.l.bf16 %v70
    %v79 = vunpack.c.l.bf16 %v71
    %v80 = vunpack.c.l.bf16 %v72
    %v81 = vunpack.c.l.bf16 %v73
    %v82 = vunpack.c.l.bf16 %v74
    %v83 = vld [vmem:[#allocation2] sm:$0xff]
    %v84 = vmul.f32 %v75, %v59
    %v85 = vmul.f32 %v76, %v60
    %v86 = vmul.f32 %v77, %v61
    %v87 = vmul.f32 %v78, %v62
    %v88 = vmul.f32 %v79, %v63
    %v89 = vmul.f32 %v80, %v64
    %v90 = vmul.f32 %v81, %v65
    %v91 = vmul.f32 %v82, %v66
    %v92 = vadd.f32 %v84, %v85
    %v93 = vadd.f32 %v92, %v86
    %v94 = vadd.f32 %v93, %v87
    %v95 = vadd.f32 %v94, %v88
    %v96 = vadd.f32 %v95, %v89
    %v97 = vadd.f32 %v96, %v90
    %v98 = vadd.f32 %v97, %v91
    %v99 = vadd.f32 %v83, %v98
    %100 = vst [vmem:[#allocation2] sm:$0xff] %v99
    %v101 = vld [vmem:[#allocation3] sm:$0xff]
    %v102 = vadd.f32 %v75, %v76
    %v103 = vadd.f32 %v102, %v77
    %v104 = vadd.f32 %v103, %v78
    %v105 = vadd.f32 %v104, %v79
    %v106 = vadd.f32 %v105, %v80
    %v107 = vadd.f32 %v106, %v81
    %v108 = vadd.f32 %v107, %v82
    %v109 = vadd.f32 %v101, %v108
    %110 = vst [vmem:[#allocation3] sm:$0xff] %v109
    %v111 = vld [vmem:[#allocation4] sm:$0xff]
    %v112 = vadd.f32 %v59, %v60
    %v113 = vadd.f32 %v112, %v61
    %v114 = vadd.f32 %v113, %v62
    %v115 = vadd.f32 %v114, %v63
    %v116 = vadd.f32 %v115, %v64
    %v117 = vadd.f32 %v116, %v65
    %v118 = vadd.f32 %v117, %v66
    %v119 = vadd.f32 %v111, %v118
    %120 = vst [vmem:[#allocation4] sm:$0xff] %v119
    // Predicated region
    $region22: #{tpu_custom_call.1} parent=1 // pred_check
      %p121 = pneg %p44
    $region23: #{tpu_custom_call.1} parent=1 // pred_check_branch
      %123 = sbr.rel (%p121) target = $region25
    $region24: #{tpu_custom_call.1} parent=1 // pred_region
      %v124 = vld [vmem:[#allocation2] sm:$0xff]
      %v125 = vrot.slane %v124, 4
      %v126 = vadd.f32 %v124, %v125
      %v127 = vrot.slane %v126, 2
      %v128 = vadd.f32 %v126, %v127
      %v129 = vrot.slane %v128, 1
      %v130 = vadd.f32 %v128, %v129
      %v131 = vld [vmem:[#allocation3] sm:$0xff]
      %v132 = vrot.slane %v131, 4
      %v133 = vadd.f32 %v131, %v132
      %v134 = vrot.slane %v133, 2
      %v135 = vadd.f32 %v133, %v134
      %v136 = vrot.slane %v135, 1
      %v137 = vadd.f32 %v135, %v136
      %v138 = vld [vmem:[#allocation4] sm:$0xff]
      %v139 = vrot.slane %v138, 4
      %v140 = vadd.f32 %v138, %v139
      %v141 = vrot.slane %v140, 2
      %v142 = vadd.f32 %v140, %v141
      %v143 = vrot.slane %v142, 1
      %v144 = vadd.f32 %v142, %v143
      %v145 = vsub.f32 %v144, %v130
      %v146 = vsub.f32 %v137, %v130
      %v147 = vadd.f32 %v130, %v145
      %v148 = vadd.f32 %v147, 1e-07
      %v149 = vrcp.pop %v148
      %v150 = vmul.f32 %v148, %v149
      %v151 = vsub.f32 1.0, %v150
      %v152 = vmul.f32 %v149, %v151
      %v153 = vadd.f32 %v149, %v152
      %vm154 = vweird.f32 %v148
      %vm155 = vweird.f32 %v149
      %vm156 = vmor %vm154, %vm155
      %v157 = vsel %vm156, %v149, %v153
      %v158 = vand.u32 2147483647, %v148
      %vm159 = vcmp.eq.f32.partialorder %v158, 8.507059e+37
      %v160 = vand.u32 %v148, 2147483648
      %v161 = vor.u32 1.1754944e-38, %v160
      %v162 = vsel %vm159, %v161, %v157
      %v163 = vmul.f32 %v130, %v162
      %v164 = vadd.f32 %v130, %v146
      %v165 = vadd.f32 %v164, 1e-07
      %v166 = vrcp.pop %v165
      %v167 = vmul.f32 %v165, %v166
      %v168 = vsub.f32 1.0, %v167
      %v169 = vmul.f32 %v166, %v168
      %v170 = vadd.f32 %v166, %v169
      %vm171 = vweird.f32 %v165
      %vm172 = vweird.f32 %v166
      %vm173 = vmor %vm171, %vm172
      %v174 = vsel %vm173, %v166, %v170
      %v175 = vand.u32 2147483647, %v165
      %vm176 = vcmp.eq.f32.partialorder %v175, 8.507059e+37
      %v177 = vand.u32 %v165, 2147483648
      %v178 = vor.u32 1.1754944e-38, %v177
      %v179 = vsel %vm176, %v178, %v174
      %v180 = vmul.f32 %v130, %v179
      %v181 = vmul.f32 %v163, 2.0
      %v182 = vmul.f32 %v181, %v180
      %v183 = vadd.f32 %v163, %v180
      %v184 = vadd.f32 %v183, 1e-07
      %v185 = vrcp.pop %v184
      %v186 = vmul.f32 %v184, %v185
      %v187 = vsub.f32 1.0, %v186
      %v188 = vmul.f32 %v185, %v187
      %v189 = vadd.f32 %v185, %v188
      %vm190 = vweird.f32 %v184
      %vm191 = vweird.f32 %v185
      %vm192 = vmor %vm190, %vm191
      %v193 = vsel %vm192, %v185, %v189
      %v194 = vand.u32 2147483647, %v184
      %vm195 = vcmp.eq.f32.partialorder %v194, 8.507059e+37
      %v196 = vand.u32 %v184, 2147483648
      %v197 = vor.u32 1.1754944e-38, %v196
      %v198 = vsel %vm195, %v197, %v193
      %v199 = vmul.f32 %v182, %v198
      %vm200 = vcmp.ne.f32.partialorder %v199, %v199
      %v201 = vsel %vm200, 0.0, %v199
      %202 = vst [vmem:[#allocation10] sm:$0x1] %v201
    $region25: #{tpu_custom_call.1} parent=1 // pred_fallthru
      _
    // Predicated region
    $region26: #{tpu_custom_call.1} parent=1 // pred_check
      _
    $region27: #{tpu_custom_call.1} parent=1 // pred_check_branch
      %204 = sbr.rel (0) target = $region29
    $region28: #{tpu_custom_call.1} parent=1 // pred_region
      %206 = vsyncadd [#allocation7], 0
      %s208 = sshll.u32 [#allocation10], 4
      %s209 = int_to_ptr.vmem [resolvable:$true] %s208
      %s210 = sshll.u32 %s2, 4
      %s211 = int_to_ptr.hbm [resolvable:$true] %s210
      %213 = dma.vmem_to_hbm [thread:$0]  %s209, 16, %s211, [#allocation7]
    $region29: #{tpu_custom_call.1} parent=1 // pred_fallthru
      _
    // Predicated region
    $region30: #{tpu_custom_call.1} parent=1 // pred_check
      _
    $region31: #{tpu_custom_call.1} parent=1 // pred_check_branch
      %215 = sbr.rel (0) target = $region33
    $region32: #{tpu_custom_call.1} parent=1 // pred_region
      %217 = dma.done [#allocation7], 16
    $region33: #{tpu_custom_call.1} parent=1 // pred_fallthru
      _
    %218 = vsyncpa [#allocation6], 1
    %219 = vsyncpa [#allocation9], 1
    %220 = vsyncpa [#allocation7], 1

</llo_original>
